<compile_context>
chip_gen: v7x
topology: tpu7x:2x2x1
jax: 0.10.0
libtpu: 0.0.40
codegen_flags: <defaults>
</compile_context>

<pallas_src>
import functools

import jax
import jax.numpy as jnp
from jax.experimental import pallas as pl
from jax.experimental.pallas import tpu as pltpu


def _round_up(n, m):
    return ((n + m - 1) // m) * m


def _tensorcores_per_device():
    """Best-effort static query: v7x exposes 2 TensorCores per chip."""
    try:
        kind = jax.devices()[0].device_kind.lower()
    except Exception:
        return 1
    return 2 if ("v7" in kind or "7x" in kind) else 1


def _make_mlp_kernel(n_linear):
    """Fused MLP kernel for `n_linear` Linear layers.

    Kernel ref order: x_ref, w0, b0, ..., w_{L-1}, b_{L-1}, o_ref.
    ReLU is applied after every layer except the last one.
    """

    def kernel(x_ref, *refs):
        o_ref = refs[-1]
        param_refs = refs[:-1]

        # Cast to bf16 in-kernel (cheap VPU pack that hides under the first
        # matmul); activations stay in vregs between layers.
        h = x_ref[...].astype(jnp.bfloat16)
        for i in range(n_linear):
            w = param_refs[2 * i][...]          # bf16 (fan_in, fan_out)
            b = param_refs[2 * i + 1][...]      # f32  (1, fan_out)
            acc = jnp.dot(h, w, preferred_element_type=jnp.float32) + b
            if i < n_linear - 1:
                h = jnp.maximum(acc, 0.0).astype(jnp.bfloat16)  # ReLU (VPU)
            else:
                o_ref[...] = acc.astype(o_ref.dtype)

    return kernel


@functools.partial(jax.jit, static_argnames=("block_b",))
def mlp_forward(x, params, *, block_b=512):
    """Runs the fused MLP Pallas kernel.

    x:       (B, in_dim) float32
    params:  flat tuple (w0, b0, w1, b1, ...), w_i: (fan_in, fan_out) f32,
             b_i: (1, fan_out) f32
    returns: (B, out_dim) float32
    """
    B, in_dim = x.shape
    out_dtype = x.dtype
    n_linear = len(params) // 2
    out_dim = params[-1].shape[-1]

    # ---- batch-tile selection -------------------------------------------
    # bf16 min tile is (16, 128) -> 16-row floor.  Prefer one large tile per
    # TensorCore; only force a split when the chip has >= 2 TCs (v7x).
    bb = min(block_b, _round_up(B, 16))
    bb = max(16, _round_up(bb, 16))
    n_tc = _tensorcores_per_device()
    if n_tc >= 2 and B > 16 and pl.cdiv(B, bb) < n_tc:
        bb = max(16, _round_up(pl.cdiv(B, n_tc), 16))
    if bb >= 128:
        bb = _round_up(bb, 128)   # full MXU row groups for big tiles
    B_pad = _round_up(B, bb)
    grid = (B_pad // bb,)

    if B_pad != B:
        x = jnp.pad(x, ((0, B_pad - B), (0, 0)))

    # ---- params: weights bf16 for the MXU, biases f32; pad last layer's
    # columns so the output block is lane-dense (multiple of 128). -----------
    out_pad = _round_up(out_dim, 128)
    kernel_params = []
    for i in range(n_linear):
        w = params[2 * i].astype(jnp.bfloat16)
        b = params[2 * i + 1].astype(jnp.float32)
        if i == n_linear - 1 and out_pad != out_dim:
            w = jnp.pad(w, ((0, 0), (0, out_pad - out_dim)))
            b = jnp.pad(b, ((0, 0), (0, out_pad - out_dim)))
        kernel_params += [w, b]

    # ---- specs ------------------------------------------------------------
    in_specs = [pl.BlockSpec((bb, in_dim), lambda i: (i, 0))]
    for p in kernel_params:
        in_specs.append(pl.BlockSpec(p.shape, lambda i: (0, 0)))
    out_specs = pl.BlockSpec((bb, out_pad), lambda i: (i, 0))

    out = pl.pallas_call(
        _make_mlp_kernel(n_linear),
        out_shape=jax.ShapeDtypeStruct((B_pad, out_pad), out_dtype),
        grid_spec=pltpu.PrefetchScalarGridSpec(
            num_scalar_prefetch=0,
            grid=grid,
            in_specs=in_specs,
            out_specs=out_specs,
        ),
        compiler_params=pltpu.CompilerParams(
            dimension_semantics=("parallel",),
        ),
    )(x, *kernel_params)

    return out[:B, :out_dim]


def init_mlp_params(key, in_dim, out_dim, hidden_dim=128, n_hidden=3):
    """Deterministic synthetic parameters matching the module's shapes."""
    dims = [in_dim] + [hidden_dim] * n_hidden + [out_dim]
    params = []
    for i in range(len(dims) - 1):
        key, kw, kb = jax.random.split(key, 3)
        fan_in, fan_out = dims[i], dims[i + 1]
        bound = 1.0 / jnp.sqrt(fan_in)  # PyTorch Linear default init scale
        w = jax.random.uniform(kw, (fan_in, fan_out), jnp.float32, -bound, bound)
        b = jax.random.uniform(kb, (1, fan_out), jnp.float32, -bound, bound)
        params += [w, b]
    return tuple(params)


def mlp_reference_f32(x, params):
    """Pure-JAX f32 reference of the same forward pass."""
    n_linear = len(params) // 2
    h = x
    for i in range(n_linear):
        h = h @ params[2 * i] + params[2 * i + 1]
        if i < n_linear - 1:
            h = jnp.maximum(h, 0.0)
    return h


def mlp_reference_matched(x, params):
    """Pure-JAX reference mirroring the kernel's bf16-matmul / f32-accum path."""
    n_linear = len(params) // 2
    h = x.astype(jnp.bfloat16)
    for i in range(n_linear):
        w = params[2 * i].astype(jnp.bfloat16)
        b = params[2 * i + 1].astype(jnp.float32)
        acc = jnp.dot(h, w, preferred_element_type=jnp.float32) + b
        if i < n_linear - 1:
            h = jnp.maximum(acc, 0.0).astype(jnp.bfloat16)
        else:
            return acc.astype(x.dtype)
    return h


if __name__ == "__main__":
    # Small shapes consistent with the module: MLP(in_dim=32, out_dim=16),
    # hidden_dim=128, n_hidden=3, batch=16.
    B, IN_DIM, OUT_DIM, HIDDEN, N_HIDDEN = 16, 32, 16, 128, 3

    key = jax.random.PRNGKey(0)
    key, kx = jax.random.split(key)
    x = jax.random.normal(kx, (B, IN_DIM), dtype=jnp.float32)
    params = init_mlp_params(key, IN_DIM, OUT_DIM, HIDDEN, N_HIDDEN)

    out = mlp_forward(x, params)
    out = jax.block_until_ready(out)

    assert out.shape == (B, OUT_DIM)

    # Tight check vs. a reference with identical bf16/f32 precision choices.
    ref_matched = mlp_reference_matched(x, params)
    assert jnp.allclose(out, ref_matched, atol=1e-2, rtol=1e-2), \
        "mismatch vs matched-precision reference"

    # Loose sanity check vs. the full-f32 reference (bf16 matmul rounding).
    ref_f32 = mlp_reference_f32(x, params)
    assert jnp.allclose(out, ref_f32, atol=0.15, rtol=0.1), \
        "mismatch vs f32 reference"

    print("KERNEL_OK")
</pallas_src>

<mosaic_0001>
module attributes {stable_mosaic.version = 11 : i64} {
  func.func @kernel(%arg0: i32, %arg1: memref<16x32xf32, #tpu.memory_space<vmem>>, %arg2: memref<32x128xbf16, #tpu.memory_space<vmem>>, %arg3: memref<1x128xf32, #tpu.memory_space<vmem>>, %arg4: memref<128x128xbf16, #tpu.memory_space<vmem>>, %arg5: memref<1x128xf32, #tpu.memory_space<vmem>>, %arg6: memref<128x128xbf16, #tpu.memory_space<vmem>>, %arg7: memref<1x128xf32, #tpu.memory_space<vmem>>, %arg8: memref<128x128xbf16, #tpu.memory_space<vmem>>, %arg9: memref<1x128xf32, #tpu.memory_space<vmem>>, %arg10: memref<16x128xf32, #tpu.memory_space<vmem>>) attributes {dimension_semantics = [#tpu.dimension_semantics<parallel>], iteration_bounds = array<i64: 1>, scalar_prefetch = 0 : i64, scratch_operands = 0 : i64, tpu.core_type = #tpu.core_type<tc>, window_params = [{transform_indices = @transform_0, window_bounds = array<i64: 16, 32>}, {pipeline_mode = #tpu.pipeline_mode<synchronous>, transform_indices = @transform_1, window_bounds = array<i64: 32, 128>}, {pipeline_mode = #tpu.pipeline_mode<synchronous>, transform_indices = @transform_2, window_bounds = array<i64: 1, 128>}, {pipeline_mode = #tpu.pipeline_mode<synchronous>, transform_indices = @transform_3, window_bounds = array<i64: 128, 128>}, {pipeline_mode = #tpu.pipeline_mode<synchronous>, transform_indices = @transform_4, window_bounds = array<i64: 1, 128>}, {pipeline_mode = #tpu.pipeline_mode<synchronous>, transform_indices = @transform_5, window_bounds = array<i64: 128, 128>}, {pipeline_mode = #tpu.pipeline_mode<synchronous>, transform_indices = @transform_6, window_bounds = array<i64: 1, 128>}, {pipeline_mode = #tpu.pipeline_mode<synchronous>, transform_indices = @transform_7, window_bounds = array<i64: 128, 128>}, {pipeline_mode = #tpu.pipeline_mode<synchronous>, transform_indices = @transform_8, window_bounds = array<i64: 1, 128>}, {transform_indices = @transform_9, window_bounds = array<i64: 16, 128>}]} {
    %c0 = arith.constant 0 : index
    %c0_0 = arith.constant 0 : index
    %0 = vector.load %arg1[%c0, %c0_0] : memref<16x32xf32, #tpu.memory_space<vmem>>, vector<16x32xf32>
    %1 = arith.truncf %0 : vector<16x32xf32> to vector<16x32xbf16>
    %c0_1 = arith.constant 0 : index
    %c0_2 = arith.constant 0 : index
    %2 = vector.load %arg2[%c0_1, %c0_2] : memref<32x128xbf16, #tpu.memory_space<vmem>>, vector<32x128xbf16>
    %c0_3 = arith.constant 0 : index
    %c0_4 = arith.constant 0 : index
    %3 = vector.load %arg3[%c0_3, %c0_4] : memref<1x128xf32, #tpu.memory_space<vmem>>, vector<1x128xf32>
    %cst = arith.constant dense<0.000000e+00> : vector<16x128xf32>
    %4 = tpu.matmul %1, %2, %cst {dimension_numbers = #tpu.dot_dimension_numbers<[1], [0], [0], [1], [0, 0, 1, 1], [], []>} : vector<16x32xbf16>, vector<32x128xbf16>, vector<16x128xf32> -> vector<16x128xf32>
    %5 = vector.broadcast %3 : vector<1x128xf32> to vector<16x128xf32>
    %6 = arith.addf %4, %5 : vector<16x128xf32>
    %cst_5 = arith.constant 0.000000e+00 : f32
    %7 = vector.broadcast %cst_5 : f32 to vector<16x128xf32>
    %8 = arith.maximumf %6, %7 : vector<16x128xf32>
    %9 = arith.truncf %8 : vector<16x128xf32> to vector<16x128xbf16>
    %c0_6 = arith.constant 0 : index
    %c0_7 = arith.constant 0 : index
    %10 = vector.load %arg4[%c0_6, %c0_7] : memref<128x128xbf16, #tpu.memory_space<vmem>>, vector<128x128xbf16>
    %c0_8 = arith.constant 0 : index
    %c0_9 = arith.constant 0 : index
    %11 = vector.load %arg5[%c0_8, %c0_9] : memref<1x128xf32, #tpu.memory_space<vmem>>, vector<1x128xf32>
    %cst_10 = arith.constant dense<0.000000e+00> : vector<16x128xf32>
    %12 = tpu.matmul %9, %10, %cst_10 {dimension_numbers = #tpu.dot_dimension_numbers<[1], [0], [0], [1], [0, 0, 1, 1], [], []>} : vector<16x128xbf16>, vector<128x128xbf16>, vector<16x128xf32> -> vector<16x128xf32>
    %13 = vector.broadcast %11 : vector<1x128xf32> to vector<16x128xf32>
    %14 = arith.addf %12, %13 : vector<16x128xf32>
    %cst_11 = arith.constant 0.000000e+00 : f32
    %15 = vector.broadcast %cst_11 : f32 to vector<16x128xf32>
    %16 = arith.maximumf %14, %15 : vector<16x128xf32>
    %17 = arith.truncf %16 : vector<16x128xf32> to vector<16x128xbf16>
    %c0_12 = arith.constant 0 : index
    %c0_13 = arith.constant 0 : index
    %18 = vector.load %arg6[%c0_12, %c0_13] : memref<128x128xbf16, #tpu.memory_space<vmem>>, vector<128x128xbf16>
    %c0_14 = arith.constant 0 : index
    %c0_15 = arith.constant 0 : index
    %19 = vector.load %arg7[%c0_14, %c0_15] : memref<1x128xf32, #tpu.memory_space<vmem>>, vector<1x128xf32>
    %cst_16 = arith.constant dense<0.000000e+00> : vector<16x128xf32>
    %20 = tpu.matmul %17, %18, %cst_16 {dimension_numbers = #tpu.dot_dimension_numbers<[1], [0], [0], [1], [0, 0, 1, 1], [], []>} : vector<16x128xbf16>, vector<128x128xbf16>, vector<16x128xf32> -> vector<16x128xf32>
    %21 = vector.broadcast %19 : vector<1x128xf32> to vector<16x128xf32>
    %22 = arith.addf %20, %21 : vector<16x128xf32>
    %cst_17 = arith.constant 0.000000e+00 : f32
    %23 = vector.broadcast %cst_17 : f32 to vector<16x128xf32>
    %24 = arith.maximumf %22, %23 : vector<16x128xf32>
    %25 = arith.truncf %24 : vector<16x128xf32> to vector<16x128xbf16>
    %c0_18 = arith.constant 0 : index
    %c0_19 = arith.constant 0 : index
    %26 = vector.load %arg8[%c0_18, %c0_19] : memref<128x128xbf16, #tpu.memory_space<vmem>>, vector<128x128xbf16>
    %c0_20 = arith.constant 0 : index
    %c0_21 = arith.constant 0 : index
    %27 = vector.load %arg9[%c0_20, %c0_21] : memref<1x128xf32, #tpu.memory_space<vmem>>, vector<1x128xf32>
    %cst_22 = arith.constant dense<0.000000e+00> : vector<16x128xf32>
    %28 = tpu.matmul %25, %26, %cst_22 {dimension_numbers = #tpu.dot_dimension_numbers<[1], [0], [0], [1], [0, 0, 1, 1], [], []>} : vector<16x128xbf16>, vector<128x128xbf16>, vector<16x128xf32> -> vector<16x128xf32>
    %29 = vector.broadcast %27 : vector<1x128xf32> to vector<16x128xf32>
    %30 = arith.addf %28, %29 : vector<16x128xf32>
    %c0_23 = arith.constant 0 : index
    %c0_24 = arith.constant 0 : index
    %31 = vector.load %arg10[%c0_23, %c0_24] : memref<16x128xf32, #tpu.memory_space<vmem>>, vector<16x128xf32>
    tpu.vector_store %arg10[%c0_23, %c0_24], %30 {strides = array<i32>} : memref<16x128xf32, #tpu.memory_space<vmem>>, vector<16x128xf32>,
    return
  }
  func.func @transform_0(%arg0: i32) -> (i32, i32) {
    %c0_i32 = arith.constant 0 : i32
    %c0_i32_0 = arith.constant 0 : i32
    return %arg0, %c0_i32 : i32, i32
  }
  func.func @transform_1(%arg0: i32) -> (i32, i32) {
    %c0_i32 = arith.constant 0 : i32
    %c0_i32_0 = arith.constant 0 : i32
    %c0_i32_1 = arith.constant 0 : i32
    return %c0_i32, %c0_i32_0 : i32, i32
  }
  func.func @transform_2(%arg0: i32) -> (i32, i32) {
    %c0_i32 = arith.constant 0 : i32
    %c0_i32_0 = arith.constant 0 : i32
    %c0_i32_1 = arith.constant 0 : i32
    return %c0_i32, %c0_i32_0 : i32, i32
  }
  func.func @transform_3(%arg0: i32) -> (i32, i32) {
    %c0_i32 = arith.constant 0 : i32
    %c0_i32_0 = arith.constant 0 : i32
    %c0_i32_1 = arith.constant 0 : i32
    return %c0_i32, %c0_i32_0 : i32, i32
  }
  func.func @transform_4(%arg0: i32) -> (i32, i32) {
    %c0_i32 = arith.constant 0 : i32
    %c0_i32_0 = arith.constant 0 : i32
    %c0_i32_1 = arith.constant 0 : i32
    return %c0_i32, %c0_i32_0 : i32, i32
  }
  func.func @transform_5(%arg0: i32) -> (i32, i32) {
    %c0_i32 = arith.constant 0 : i32
    %c0_i32_0 = arith.constant 0 : i32
    %c0_i32_1 = arith.constant 0 : i32
    return %c0_i32, %c0_i32_0 : i32, i32
  }
  func.func @transform_6(%arg0: i32) -> (i32, i32) {
    %c0_i32 = arith.constant 0 : i32
    %c0_i32_0 = arith.constant 0 : i32
    %c0_i32_1 = arith.constant 0 : i32
    return %c0_i32, %c0_i32_0 : i32, i32
  }
  func.func @transform_7(%arg0: i32) -> (i32, i32) {
    %c0_i32 = arith.constant 0 : i32
    %c0_i32_0 = arith.constant 0 : i32
    %c0_i32_1 = arith.constant 0 : i32
    return %c0_i32, %c0_i32_0 : i32, i32
  }
  func.func @transform_8(%arg0: i32) -> (i32, i32) {
    %c0_i32 = arith.constant 0 : i32
    %c0_i32_0 = arith.constant 0 : i32
    %c0_i32_1 = arith.constant 0 : i32
    return %c0_i32, %c0_i32_0 : i32, i32
  }
  func.func @transform_9(%arg0: i32) -> (i32, i32) {
    %c0_i32 = arith.constant 0 : i32
    %c0_i32_0 = arith.constant 0 : i32
    return %arg0, %c0_i32 : i32, i32
  }
}

</mosaic_0001>

<llo_original>
// kernel: mlp_forward.1
$region0: #{mlp_forward.1}
  #allocation0 [shape = 'u32[]', space=smem, size = 0x4, offset = 0x4, fixed_abs, tag = 'smem constant byte address 0x4 - core index']
  #allocation1 [shape = 'u32[144,128]{1,0:T(1,128)}', space=vmem, size = 0x12000, scoped, tag = 'internal scratch']
  %s0 = inlined_call_operand.vmem [shape: f32[16,32], index: 0, kind: input, shape index: {}]
  %s1 = inlined_call_operand.vmem [shape: bf16[32,128], index: 1, kind: input, shape index: {}]
  %s2 = inlined_call_operand.vmem [shape: f32[1,128], index: 2, kind: input, shape index: {}]
  %s3 = inlined_call_operand.vmem [shape: bf16[128,128], index: 3, kind: input, shape index: {}]
  %s4 = inlined_call_operand.vmem [shape: f32[1,128], index: 4, kind: input, shape index: {}]
  %s5 = inlined_call_operand.vmem [shape: bf16[128,128], index: 5, kind: input, shape index: {}]
  %s6 = inlined_call_operand.vmem [shape: f32[1,128], index: 6, kind: input, shape index: {}]
  %s7 = inlined_call_operand.vmem [shape: bf16[128,128], index: 7, kind: input, shape index: {}]
  %s8 = inlined_call_operand.vmem [shape: f32[1,128], index: 8, kind: input, shape index: {}]
  %s9 = inlined_call_operand.hbm [shape: f32[16,128], index: 9, kind: output, shape index: {}]
  %s10 = sld [smem:[#allocation0]]
  $region46: #{mlp_forward.1} parent=0
    _
  %s12 = ssub.s32 1, %s10
  %s13 = scalar_select 0, %s12, %s10
  $region1: #{mlp_forward.1} parent=0
    #allocation2 [shape = 'u8[8192]{0}', space=vmem, size = 0x2000, scoped, tag = 'output window, operand 0, single buffered']
    #allocation3 [shape = 's32[1]{0}', space=sflag, size = 0x4, scoped, tag = 'scoped memory for mlp_forward.1']
    %14 = vsyncpa [#allocation3], 0
    // Predicated region
    $region2: #{mlp_forward.1} parent=1 // pred_check
      _
    $region3: #{mlp_forward.1} parent=1 // pred_check_branch
      %16 = sbr.rel (0) target = $region5
    $region4: #{mlp_forward.1} parent=1 // pred_region
      _
    $region5: #{mlp_forward.1} parent=1 // pred_fallthru
      _
    // Predicated region
    $region6: #{mlp_forward.1} parent=1 // pred_check
      _
    $region7: #{mlp_forward.1} parent=1 // pred_check_branch
      %18 = sbr.rel (0) target = $region9
    $region8: #{mlp_forward.1} parent=1 // pred_region
      _
    $region9: #{mlp_forward.1} parent=1 // pred_fallthru
      _
    // Predicated region
    $region10: #{mlp_forward.1} parent=1 // pred_check
      _
    $region11: #{mlp_forward.1} parent=1 // pred_check_branch
      %20 = sbr.rel (0) target = $region13
    $region12: #{mlp_forward.1} parent=1 // pred_region
      _
    $region13: #{mlp_forward.1} parent=1 // pred_fallthru
      _
    // Predicated region
    $region14: #{mlp_forward.1} parent=1 // pred_check
      _
    $region15: #{mlp_forward.1} parent=1 // pred_check_branch
      %22 = sbr.rel (0) target = $region17
    $region16: #{mlp_forward.1} parent=1 // pred_region
      _
    $region17: #{mlp_forward.1} parent=1 // pred_fallthru
      _
    // Predicated region
    $region18: #{mlp_forward.1} parent=1 // pred_check
      _
    $region19: #{mlp_forward.1} parent=1 // pred_check_branch
      %24 = sbr.rel (0) target = $region21
    $region20: #{mlp_forward.1} parent=1 // pred_region
      _
    $region21: #{mlp_forward.1} parent=1 // pred_fallthru
      _
    // Predicated region
    $region22: #{mlp_forward.1} parent=1 // pred_check
      _
    $region23: #{mlp_forward.1} parent=1 // pred_check_branch
      %26 = sbr.rel (0) target = $region25
    $region24: #{mlp_forward.1} parent=1 // pred_region
      _
    $region25: #{mlp_forward.1} parent=1 // pred_fallthru
      _
    // Predicated region
    $region26: #{mlp_forward.1} parent=1 // pred_check
      _
    $region27: #{mlp_forward.1} parent=1 // pred_check_branch
      %28 = sbr.rel (0) target = $region29
    $region28: #{mlp_forward.1} parent=1 // pred_region
      _
    $region29: #{mlp_forward.1} parent=1 // pred_fallthru
      _
    // Predicated region
    $region30: #{mlp_forward.1} parent=1 // pred_check
      _
    $region31: #{mlp_forward.1} parent=1 // pred_check_branch
      %30 = sbr.rel (0) target = $region33
    $region32: #{mlp_forward.1} parent=1 // pred_region
      _
    $region33: #{mlp_forward.1} parent=1 // pred_fallthru
      _
    // Predicated region
    $region34: #{mlp_forward.1} parent=1 // pred_check
      _
    $region35: #{mlp_forward.1} parent=1 // pred_check_branch
      %32 = sbr.rel (0) target = $region37
    $region36: #{mlp_forward.1} parent=1 // pred_region
      _
    $region37: #{mlp_forward.1} parent=1 // pred_fallthru
      _
    %v34 = vld [vmem:[%s0] sm:$0xff]
    %v35 = vld [vmem:[%s0 + $0x8] sm:$0xff]
    %v36 = vpack.c.bf16 %v35, %v34
    %v37 = vld [vmem:[%s1] sm:$0xf]
    %v38 = vld [vmem:[%s1 + $0x4] sm:$0xf]
    %v39 = vld [vmem:[%s1 + $0x8] sm:$0xf]
    %v40 = vld [vmem:[%s1 + $0xc] sm:$0xf]
    %v41 = vld [vmem:[%s2] sm:$0x1]
    %v43 = vlaneseq
    %v44 = vshrl.u32 %v43, 7
    %v45 = vsub.s32 0, %v44
    %v46 = vrot.slane %v41, %v45
    %v52 = vunpack.c.l.b16 %v37
    %v53 = vunpack.c.l.b16 %v38
    %v54 = vunpack.c.l.b16 %v39
    %v55 = vunpack.c.l.b16 %v40
    %v56 = vpack.c.b16 %v53, %v52
    %v57 = vpack.c.b16 %v55, %v54
    %vm60 = vcmask 261120
    %v62 = vsel %vm60, %v36, 0
    %64 = vmatprep.subr.bf16.mxu0 0
    %65 = vmatpush1.bf16.msra.mxu0 %v56
    %66 = vmatprep.subr.bf16.mxu0 0
    %67 = vmatpush1.bf16.msra.mxu0 %v57
    %68 = vmatprep.subr.bf16.mxu0 0
    %69 = vmatpush1.bf16.msra.mxu0 0
    %70 = vmatprep.subr.bf16.mxu0 0
    %71 = vmatpush1.bf16.msra.mxu0 0
    %72 = vmatprep.subr.bf16.mxu0 0
    %73 = vmatpush1.bf16.msra.mxu0 0
    %74 = vmatprep.subr.bf16.mxu0 0
    %75 = vmatpush1.bf16.msra.mxu0 0
    %76 = vmatprep.subr.bf16.mxu0 0
    %77 = vmatpush1.bf16.msra.mxu0 0
    %78 = vmatprep.subr.bf16.mxu0 0
    %79 = vmatpush1.bf16.msra.mxu0 0
    %80 = vmatprep.subr.bf16.mxu0 0
    %81 = vmatpush1.bf16.msra.mxu0 0
    %82 = vmatprep.subr.bf16.mxu0 0
    %83 = vmatpush1.bf16.msra.mxu0 0
    %84 = vmatprep.subr.bf16.mxu0 0
    %85 = vmatpush1.bf16.msra.mxu0 0
    %86 = vmatprep.subr.bf16.mxu0 0
    %87 = vmatpush1.bf16.msra.mxu0 0
    %88 = vmatprep.subr.bf16.mxu0 0
    %89 = vmatpush1.bf16.msra.mxu0 0
    %90 = vmatprep.subr.bf16.mxu0 0
    %91 = vmatpush1.bf16.msra.mxu0 0
    %92 = vmatprep.subr.bf16.mxu0 0
    %93 = vmatpush1.bf16.msra.mxu0 0
    %94 = vmatprep.subr.bf16.mxu0 0
    %95 = vmatpush1.bf16.msra.mxu0 0
    %96 = vmatprep.mubr.bf16.mxu0 0
    %97 = vmatmul.mubr.bf16.gmra.mrb[0].mxu0 %v62
    %v98 = vpop.f32.mrb[0].mxu0
    %v99 = vadd.f32 %v46, %v98
    %v100 = vpop.f32.mrb[0].mxu0
    %v101 = vpop.f32.mrb[0].mxu0
    %v102 = vadd.f32 %v46, %v101
    %v103 = vpop.f32.mrb[0].mxu0
    %104 = vdwg.mxu0
    %v105 = vmax.f32 %v99, 0.0
    %v106 = vmax.f32 %v102, 0.0
    %v107 = vpack.c.bf16 %v106, %v105
    %v108 = vld [vmem:[%s3] sm:$0xf]
    %v109 = vld [vmem:[%s3 + $0x4] sm:$0xf]
    %v110 = vld [vmem:[%s3 + $0x8] sm:$0xf]
    %v111 = vld [vmem:[%s3 + $0xc] sm:$0xf]
    %v112 = vld [vmem:[%s3 + $0x10] sm:$0xf]
    %v113 = vld [vmem:[%s3 + $0x14] sm:$0xf]
    %v114 = vld [vmem:[%s3 + $0x18] sm:$0xf]
    %v115 = vld [vmem:[%s3 + $0x1c] sm:$0xf]
    %v116 = vld [vmem:[%s3 + $0x20] sm:$0xf]
    %v117 = vld [vmem:[%s3 + $0x24] sm:$0xf]
    %v118 = vld [vmem:[%s3 + $0x28] sm:$0xf]
    %v119 = vld [vmem:[%s3 + $0x2c] sm:$0xf]
    %v120 = vld [vmem:[%s3 + $0x30] sm:$0xf]
    %v121 = vld [vmem:[%s3 + $0x34] sm:$0xf]
    %v122 = vld [vmem:[%s3 + $0x38] sm:$0xf]
    %v123 = vld [vmem:[%s3 + $0x3c] sm:$0xf]
    %v124 = vld [vmem:[%s4] sm:$0x1]
    %v126 = vlaneseq
    %v127 = vshrl.u32 %v126, 7
    %v128 = vsub.s32 0, %v127
    %v129 = vrot.slane %v124, %v128
    %v147 = vunpack.c.l.b16 %v108
    %v148 = vunpack.c.l.b16 %v109
    %v149 = vunpack.c.l.b16 %v110
    %v150 = vunpack.c.l.b16 %v111
    %v151 = vunpack.c.l.b16 %v112
    %v152 = vunpack.c.l.b16 %v113
    %v153 = vunpack.c.l.b16 %v114
    %v154 = vunpack.c.l.b16 %v115
    %v155 = vunpack.c.l.b16 %v116
    %v156 = vunpack.c.l.b16 %v117
    %v157 = vunpack.c.l.b16 %v118
    %v158 = vunpack.c.l.b16 %v119
    %v159 = vunpack.c.l.b16 %v120
    %v160 = vunpack.c.l.b16 %v121
    %v161 = vunpack.c.l.b16 %v122
    %v162 = vunpack.c.l.b16 %v123
    %v163 = vpack.c.b16 %v148, %v147
    %v164 = vpack.c.b16 %v150, %v149
    %v165 = vpack.c.b16 %v152, %v151
    %v166 = vpack.c.b16 %v154, %v153
    %v167 = vpack.c.b16 %v156, %v155
    %v168 = vpack.c.b16 %v158, %v157
    %v169 = vpack.c.b16 %v160, %v159
    %v170 = vpack.c.b16 %v162, %v161
    %179 = vmatprep.subr.bf16.mxu0 0
    %180 = vmatpush1.bf16.msra.mxu0 %v163
    %181 = vmatprep.subr.bf16.mxu0 0
    %182 = vmatpush1.bf16.msra.mxu0 %v164
    %183 = vmatprep.subr.bf16.mxu0 0
    %184 = vmatpush1.bf16.msra.mxu0 %v165
    %185 = vmatprep.subr.bf16.mxu0 0
    %186 = vmatpush1.bf16.msra.mxu0 %v166
    %187 = vmatprep.subr.bf16.mxu0 0
    %188 = vmatpush1.bf16.msra.mxu0 %v167
    %189 = vmatprep.subr.bf16.mxu0 0
    %190 = vmatpush1.bf16.msra.mxu0 %v168
    %191 = vmatprep.subr.bf16.mxu0 0
    %192 = vmatpush1.bf16.msra.mxu0 %v169
    %193 = vmatprep.subr.bf16.mxu0 0
    %194 = vmatpush1.bf16.msra.mxu0 %v170
    %195 = vmatprep.subr.bf16.mxu0 0
    %196 = vmatpush1.bf16.msra.mxu0 0
    %197 = vmatprep.subr.bf16.mxu0 0
    %198 = vmatpush1.bf16.msra.mxu0 0
    %199 = vmatprep.subr.bf16.mxu0 0
    %200 = vmatpush1.bf16.msra.mxu0 0
    %201 = vmatprep.subr.bf16.mxu0 0
    %202 = vmatpush1.bf16.msra.mxu0 0
    %203 = vmatprep.subr.bf16.mxu0 0
    %204 = vmatpush1.bf16.msra.mxu0 0
    %205 = vmatprep.subr.bf16.mxu0 0
    %206 = vmatpush1.bf16.msra.mxu0 0
    %207 = vmatprep.subr.bf16.mxu0 0
    %208 = vmatpush1.bf16.msra.mxu0 0
    %209 = vmatprep.subr.bf16.mxu0 0
    %210 = vmatpush1.bf16.msra.mxu0 0
    %211 = vmatprep.mubr.bf16.mxu0 0
    %212 = vmatmul.mubr.bf16.gmra.mrb[0].mxu0 %v107
    %v213 = vpop.f32.mrb[0].mxu0
    %v214 = vadd.f32 %v129, %v213
    %v215 = vpop.f32.mrb[0].mxu0
    %v216 = vpop.f32.mrb[0].mxu0
    %v217 = vadd.f32 %v129, %v216
    %v218 = vpop.f32.mrb[0].mxu0
    %219 = vdwg.mxu0
    %v220 = vmax.f32 %v214, 0.0
    %v221 = vmax.f32 %v217, 0.0
    %v222 = vpack.c.bf16 %v221, %v220
    %v223 = vld [vmem:[%s5] sm:$0xf]
    %v224 = vld [vmem:[%s5 + $0x4] sm:$0xf]
    %v225 = vld [vmem:[%s5 + $0x8] sm:$0xf]
    %v226 = vld [vmem:[%s5 + $0xc] sm:$0xf]
    %v227 = vld [vmem:[%s5 + $0x10] sm:$0xf]
    %v228 = vld [vmem:[%s5 + $0x14] sm:$0xf]
    %v229 = vld [vmem:[%s5 + $0x18] sm:$0xf]
    %v230 = vld [vmem:[%s5 + $0x1c] sm:$0xf]
    %v231 = vld [vmem:[%s5 + $0x20] sm:$0xf]
    %v232 = vld [vmem:[%s5 + $0x24] sm:$0xf]
    %v233 = vld [vmem:[%s5 + $0x28] sm:$0xf]
    %v234 = vld [vmem:[%s5 + $0x2c] sm:$0xf]
    %v235 = vld [vmem:[%s5 + $0x30] sm:$0xf]
    %v236 = vld [vmem:[%s5 + $0x34] sm:$0xf]
    %v237 = vld [vmem:[%s5 + $0x38] sm:$0xf]
    %v238 = vld [vmem:[%s5 + $0x3c] sm:$0xf]
    %v239 = vld [vmem:[%s6] sm:$0x1]
    %v241 = vlaneseq
    %v242 = vshrl.u32 %v241, 7
    %v243 = vsub.s32 0, %v242
    %v244 = vrot.slane %v239, %v243
    %v262 = vunpack.c.l.b16 %v223
    %v263 = vunpack.c.l.b16 %v224
    %v264 = vunpack.c.l.b16 %v225
    %v265 = vunpack.c.l.b16 %v226
    %v266 = vunpack.c.l.b16 %v227
    %v267 = vunpack.c.l.b16 %v228
    %v268 = vunpack.c.l.b16 %v229
    %v269 = vunpack.c.l.b16 %v230
    %v270 = vunpack.c.l.b16 %v231
    %v271 = vunpack.c.l.b16 %v232
    %v272 = vunpack.c.l.b16 %v233
    %v273 = vunpack.c.l.b16 %v234
    %v274 = vunpack.c.l.b16 %v235
    %v275 = vunpack.c.l.b16 %v236
    %v276 = vunpack.c.l.b16 %v237
    %v277 = vunpack.c.l.b16 %v238
    %v278 = vpack.c.b16 %v263, %v262
    %v279 = vpack.c.b16 %v265, %v264
    %v280 = vpack.c.b16 %v267, %v266
    %v281 = vpack.c.b16 %v269, %v268
    %v282 = vpack.c.b16 %v271, %v270
    %v283 = vpack.c.b16 %v273, %v272
    %v284 = vpack.c.b16 %v275, %v274
    %v285 = vpack.c.b16 %v277, %v276
    %294 = vmatprep.subr.bf16.mxu0 0
    %295 = vmatpush1.bf16.msra.mxu0 %v278
    %296 = vmatprep.subr.bf16.mxu0 0
    %297 = vmatpush1.bf16.msra.mxu0 %v279
    %298 = vmatprep.subr.bf16.mxu0 0
    %299 = vmatpush1.bf16.msra.mxu0 %v280
    %300 = vmatprep.subr.bf16.mxu0 0
    %301 = vmatpush1.bf16.msra.mxu0 %v281
    %302 = vmatprep.subr.bf16.mxu0 0
    %303 = vmatpush1.bf16.msra.mxu0 %v282
    %304 = vmatprep.subr.bf16.mxu0 0
    %305 = vmatpush1.bf16.msra.mxu0 %v283
    %306 = vmatprep.subr.bf16.mxu0 0
    %307 = vmatpush1.bf16.msra.mxu0 %v284
    %308 = vmatprep.subr.bf16.mxu0 0
    %309 = vmatpush1.bf16.msra.mxu0 %v285
    %310 = vmatprep.subr.bf16.mxu0 0
    %311 = vmatpush1.bf16.msra.mxu0 0
    %312 = vmatprep.subr.bf16.mxu0 0
    %313 = vmatpush1.bf16.msra.mxu0 0
    %314 = vmatprep.subr.bf16.mxu0 0
    %315 = vmatpush1.bf16.msra.mxu0 0
    %316 = vmatprep.subr.bf16.mxu0 0
    %317 = vmatpush1.bf16.msra.mxu0 0
    %318 = vmatprep.subr.bf16.mxu0 0
    %319 = vmatpush1.bf16.msra.mxu0 0
    %320 = vmatprep.subr.bf16.mxu0 0
    %321 = vmatpush1.bf16.msra.mxu0 0
    %322 = vmatprep.subr.bf16.mxu0 0
    %323 = vmatpush1.bf16.msra.mxu0 0
    %324 = vmatprep.subr.bf16.mxu0 0
    %325 = vmatpush1.bf16.msra.mxu0 0
    %326 = vmatprep.mubr.bf16.mxu0 0
    %327 = vmatmul.mubr.bf16.gmra.mrb[0].mxu0 %v222
    %v328 = vpop.f32.mrb[0].mxu0
    %v329 = vadd.f32 %v244, %v328
    %v330 = vpop.f32.mrb[0].mxu0
    %v331 = vpop.f32.mrb[0].mxu0
    %v332 = vadd.f32 %v244, %v331
    %v333 = vpop.f32.mrb[0].mxu0
    %334 = vdwg.mxu0
    %v335 = vmax.f32 %v329, 0.0
    %v336 = vmax.f32 %v332, 0.0
    %v337 = vpack.c.bf16 %v336, %v335
    %v338 = vld [vmem:[%s7] sm:$0xf]
    %v339 = vld [vmem:[%s7 + $0x4] sm:$0xf]
    %v340 = vld [vmem:[%s7 + $0x8] sm:$0xf]
    %v341 = vld [vmem:[%s7 + $0xc] sm:$0xf]
    %v342 = vld [vmem:[%s7 + $0x10] sm:$0xf]
    %v343 = vld [vmem:[%s7 + $0x14] sm:$0xf]
    %v344 = vld [vmem:[%s7 + $0x18] sm:$0xf]
    %v345 = vld [vmem:[%s7 + $0x1c] sm:$0xf]
    %v346 = vld [vmem:[%s7 + $0x20] sm:$0xf]
    %v347 = vld [vmem:[%s7 + $0x24] sm:$0xf]
    %v348 = vld [vmem:[%s7 + $0x28] sm:$0xf]
    %v349 = vld [vmem:[%s7 + $0x2c] sm:$0xf]
    %v350 = vld [vmem:[%s7 + $0x30] sm:$0xf]
    %v351 = vld [vmem:[%s7 + $0x34] sm:$0xf]
    %v352 = vld [vmem:[%s7 + $0x38] sm:$0xf]
    %v353 = vld [vmem:[%s7 + $0x3c] sm:$0xf]
    %v354 = vld [vmem:[%s8] sm:$0x1]
    %v356 = vlaneseq
    %v357 = vshrl.u32 %v356, 7
    %v358 = vsub.s32 0, %v357
    %v359 = vrot.slane %v354, %v358
    %v377 = vunpack.c.l.b16 %v338
    %v378 = vunpack.c.l.b16 %v339
    %v379 = vunpack.c.l.b16 %v340
    %v380 = vunpack.c.l.b16 %v341
    %v381 = vunpack.c.l.b16 %v342
    %v382 = vunpack.c.l.b16 %v343
    %v383 = vunpack.c.l.b16 %v344
    %v384 = vunpack.c.l.b16 %v345
    %v385 = vunpack.c.l.b16 %v346
    %v386 = vunpack.c.l.b16 %v347
    %v387 = vunpack.c.l.b16 %v348
    %v388 = vunpack.c.l.b16 %v349
    %v389 = vunpack.c.l.b16 %v350
    %v390 = vunpack.c.l.b16 %v351
    %v391 = vunpack.c.l.b16 %v352
    %v392 = vunpack.c.l.b16 %v353
    %v393 = vpack.c.b16 %v378, %v377
    %v394 = vpack.c.b16 %v380, %v379
    %v395 = vpack.c.b16 %v382, %v381
    %v396 = vpack.c.b16 %v384, %v383
    %v397 = vpack.c.b16 %v386, %v385
    %v398 = vpack.c.b16 %v388, %v387
    %v399 = vpack.c.b16 %v390, %v389
    %v400 = vpack.c.b16 %v392, %v391
    %409 = vmatprep.subr.bf16.mxu0 0
    %410 = vmatpush1.bf16.msra.mxu0 %v393
    %411 = vmatprep.subr.bf16.mxu0 0
    %412 = vmatpush1.bf16.msra.mxu0 %v394
    %413 = vmatprep.subr.bf16.mxu0 0
    %414 = vmatpush1.bf16.msra.mxu0 %v395
    %415 = vmatprep.subr.bf16.mxu0 0
    %416 = vmatpush1.bf16.msra.mxu0 %v396
    %417 = vmatprep.subr.bf16.mxu0 0
    %418 = vmatpush1.bf16.msra.mxu0 %v397
    %419 = vmatprep.subr.bf16.mxu0 0
    %420 = vmatpush1.bf16.msra.mxu0 %v398
    %421 = vmatprep.subr.bf16.mxu0 0
    %422 = vmatpush1.bf16.msra.mxu0 %v399
    %423 = vmatprep.subr.bf16.mxu0 0
    %424 = vmatpush1.bf16.msra.mxu0 %v400
    %425 = vmatprep.subr.bf16.mxu0 0
    %426 = vmatpush1.bf16.msra.mxu0 0
    %427 = vmatprep.subr.bf16.mxu0 0
    %428 = vmatpush1.bf16.msra.mxu0 0
    %429 = vmatprep.subr.bf16.mxu0 0
    %430 = vmatpush1.bf16.msra.mxu0 0
    %431 = vmatprep.subr.bf16.mxu0 0
    %432 = vmatpush1.bf16.msra.mxu0 0
    %433 = vmatprep.subr.bf16.mxu0 0
    %434 = vmatpush1.bf16.msra.mxu0 0
    %435 = vmatprep.subr.bf16.mxu0 0
    %436 = vmatpush1.bf16.msra.mxu0 0
    %437 = vmatprep.subr.bf16.mxu0 0
    %438 = vmatpush1.bf16.msra.mxu0 0
    %439 = vmatprep.subr.bf16.mxu0 0
    %440 = vmatpush1.bf16.msra.mxu0 0
    %441 = vmatprep.mubr.bf16.mxu0 0
    %442 = vmatmul.mubr.bf16.gmra.mrb[0].mxu0 %v337
    %v443 = vpop.f32.mrb[0].mxu0
    %v444 = vadd.f32 %v359, %v443
    %v445 = vpop.f32.mrb[0].mxu0
    %v446 = vpop.f32.mrb[0].mxu0
    %v447 = vadd.f32 %v359, %v446
    %v448 = vpop.f32.mrb[0].mxu0
    %449 = vdwg.mxu0
    %450 = vst [vmem:[#allocation2] sm:$0xff] %v444
    %451 = vst [vmem:[#allocation2 + $0x8] sm:$0xff] %v447
    // Predicated region
    $region38: #{mlp_forward.1} parent=1 // pred_check
      _
    $region39: #{mlp_forward.1} parent=1 // pred_check_branch
      %453 = sbr.rel (0) target = $region41
    $region40: #{mlp_forward.1} parent=1 // pred_region
      %s455 = ssub.s32 256, 256
      %456 = vsyncadd [#allocation3], %s455
      %s457 = sshll.u32 [#allocation2], 4
      %s458 = int_to_ptr.vmem [resolvable:$true] %s457
      %463 = dma.vmem_to_hbm [thread:$0]  %s458, 256, %s9, [#allocation3], 128, 128, 8
    $region41: #{mlp_forward.1} parent=1 // pred_fallthru
      _
    // Predicated region
    $region42: #{mlp_forward.1} parent=1 // pred_check
      _
    $region43: #{mlp_forward.1} parent=1 // pred_check_branch
      %465 = sbr.rel (0) target = $region45
    $region44: #{mlp_forward.1} parent=1 // pred_region
      %466 = dma.done [#allocation3], 256
    $region45: #{mlp_forward.1} parent=1 // pred_fallthru
      _
    %467 = vsyncpa [#allocation3], 1

</llo_original>
